<compile_context>
chip_gen: v6e
topology: v6e:2x2x1
jax: 0.10.0
libtpu: 0.0.40
codegen_flags: <defaults>
</compile_context>

<pallas_src>
import functools

import jax
import jax.numpy as jnp
from jax.experimental import pallas as pl
from jax.experimental.pallas import tpu as pltpu

LANE = 128
TARGET_TILE_ROWS = 2048   # (2048, 128) f32 tile = 1 MiB per pipeline buffer
NUM_CORES = 2             # row-block split across the 2 TCs of a v7x chip


def _cdiv(a, b):
    return -(-a // b)


def _mse_kernel(s_ref, t_ref, out_ref, acc_ref, *,
                steps, tile_rows, rows_valid, need_mask):
    c = pl.program_id(0)   # core / row-range split (parallel axis)
    i = pl.program_id(1)   # streaming reduction axis (arbitrary)

    @pl.when(i == 0)
    def _():
        acc_ref[...] = jnp.zeros_like(acc_ref)

    d = s_ref[...].astype(jnp.float32) - t_ref[...].astype(jnp.float32)
    sq = d * d
    if need_mask:
        # Zero rows that fall outside the real array (ragged last block, or
        # overshoot steps whose index_map was clamped).
        row0 = (c * steps + i) * tile_rows
        row_idx = row0 + jax.lax.broadcasted_iota(jnp.int32, sq.shape, 0)
        sq = jnp.where(row_idx < rows_valid, sq, 0.0)
    acc_ref[...] += sq

    @pl.when(i == steps - 1)
    def _():
        total = jnp.sum(acc_ref[...])
        out_ref[...] = jnp.full(out_ref.shape, total, dtype=out_ref.dtype)


@jax.jit
def hint_loss(f_s, f_t):
    """MSE(f_s, f_t) with mean reduction (nn.MSELoss), via a Pallas TPU kernel."""
    assert f_s.shape == f_t.shape, "FitNet hint loss expects matching shapes"
    n = f_s.size

    flat_s = f_s.reshape(-1)
    flat_t = f_t.reshape(-1)

    # Pad only when n is not a multiple of the 128-lane width (otherwise the
    # reshape is a free layout change and no extra HBM traffic is generated).
    pad = (-n) % LANE
    if pad:
        flat_s = jnp.pad(flat_s, (0, pad))
        flat_t = jnp.pad(flat_t, (0, pad))

    rows = (n + pad) // LANE
    s2 = flat_s.reshape(rows, LANE)
    t2 = flat_t.reshape(rows, LANE)

    # Big streaming tiles; if the slab is smaller than the target tile, use the
    # full slab (block == full array dims is always legal).
    tile_rows = min(TARGET_TILE_ROWS, rows)
    total_blocks = _cdiv(rows, tile_rows)
    cores = min(NUM_CORES, total_blocks)
    steps = _cdiv(total_blocks, cores)

    need_clamp = cores * steps != total_blocks
    need_mask = cores * steps * tile_rows != rows

    if need_clamp:
        def in_index(c, i):
            return (jnp.minimum(c * steps + i, total_blocks - 1), 0)
    else:
        def in_index(c, i):
            return (c * steps + i, 0)

    kernel = functools.partial(
        _mse_kernel, steps=steps, tile_rows=tile_rows,
        rows_valid=rows, need_mask=need_mask)

    itemsize = jnp.dtype(f_s.dtype).itemsize
    cost = pl.CostEstimate(
        flops=3 * n, transcendentals=0,
        bytes_accessed=2 * n * itemsize + cores * 8 * LANE * 4)

    partials = pl.pallas_call(
        kernel,
        out_shape=jax.ShapeDtypeStruct((cores, 8, LANE), jnp.float32),
        grid_spec=pltpu.PrefetchScalarGridSpec(
            num_scalar_prefetch=0,
            grid=(cores, steps),
            in_specs=[
                pl.BlockSpec((tile_rows, LANE), in_index),
                pl.BlockSpec((tile_rows, LANE), in_index),
            ],
            out_specs=pl.BlockSpec((1, 8, LANE), lambda c, i: (c, 0, 0)),
            scratch_shapes=[pltpu.VMEM((tile_rows, LANE), jnp.float32)],
        ),
        compiler_params=pltpu.CompilerParams(
            dimension_semantics=("parallel", "arbitrary"),
        ),
        cost_estimate=cost,
    )(s2, t2)

    # Each core broadcast-wrote its partial sum over its (8, 128) output block.
    return jnp.sum(partials[:, 0, 0]) / n


if __name__ == "__main__":
    root = jax.random.PRNGKey(0)

    def run_check(key, shape, dtype=jnp.float32, rtol=1e-4, atol=1e-6):
        k_s, k_t = jax.random.split(key)
        f_s = jax.random.normal(k_s, shape, dtype=jnp.float32).astype(dtype)
        f_t = jax.random.normal(k_t, shape, dtype=jnp.float32).astype(dtype)
        loss = jax.block_until_ready(hint_loss(f_s, f_t))
        ref = jnp.mean((f_s.astype(jnp.float32) - f_t.astype(jnp.float32)) ** 2)
        assert jnp.allclose(loss, ref, rtol=rtol, atol=atol), (shape, dtype, loss, ref)
        return loss

    keys = jax.random.split(root, 4)
    # Primary small NCHW example: batch=2, channels=4, spatial=16x16.
    run_check(keys[0], (2, 4, 16, 16))
    # Multi-block / two-"core" path with ragged last block (mask + clamped map).
    run_check(keys[1], (6, 32, 64, 64))
    # Element count not a multiple of 128 (exercises the small pad path).
    run_check(keys[2], (2, 3, 5, 7))
    # bf16 inputs: DMA stays bf16, upcast to f32 only inside the kernel.
    run_check(keys[3], (2, 4, 16, 16), dtype=jnp.bfloat16, rtol=5e-3, atol=1e-3)

    print("KERNEL_OK")
</pallas_src>

<mosaic_0001>
module attributes {stable_mosaic.version = 11 : i64} {
  func.func @_mse_kernel(%arg0: i32, %arg1: i32, %arg2: memref<16x128xf32, #tpu.memory_space<vmem>>, %arg3: memref<16x128xf32, #tpu.memory_space<vmem>>, %arg4: memref<1x8x128xf32, #tpu.memory_space<vmem>>, %arg5: memref<16x128xf32, #tpu.memory_space<vmem>>) attributes {dimension_semantics = [#tpu.dimension_semantics<parallel>, #tpu.dimension_semantics<arbitrary>], iteration_bounds = array<i64: 1, 1>, scalar_prefetch = 0 : i64, scratch_operands = 1 : i64, tpu.core_type = #tpu.core_type<tc>, window_params = [{transform_indices = @transform_0, window_bounds = array<i64: 16, 128>}, {transform_indices = @transform_1, window_bounds = array<i64: 16, 128>}, {transform_indices = @transform_2, window_bounds = array<i64: 1, 8, 128>}]} {
    %c0_i32 = arith.constant 0 : i32
    %0 = arith.cmpi eq, %arg1, %c0_i32 : i32
    %1 = arith.extui %0 : i1 to i32
    %c0_i32_0 = arith.constant 0 : i32
    %2 = arith.cmpi ne, %1, %c0_i32_0 : i32
    scf.if %2 {
      %cst = arith.constant 0.000000e+00 : f32
      %13 = vector.broadcast %cst : f32 to vector<16x128xf32>
      %c0_10 = arith.constant 0 : index
      %c0_11 = arith.constant 0 : index
      %14 = vector.load %arg5[%c0_10, %c0_11] : memref<16x128xf32, #tpu.memory_space<vmem>>, vector<16x128xf32>
      tpu.vector_store %arg5[%c0_10, %c0_11], %13 {strides = array<i32>} : memref<16x128xf32, #tpu.memory_space<vmem>>, vector<16x128xf32>,
    } else {
    }
    %c0 = arith.constant 0 : index
    %c0_1 = arith.constant 0 : index
    %3 = vector.load %arg2[%c0, %c0_1] : memref<16x128xf32, #tpu.memory_space<vmem>>, vector<16x128xf32>
    %c0_2 = arith.constant 0 : index
    %c0_3 = arith.constant 0 : index
    %4 = vector.load %arg3[%c0_2, %c0_3] : memref<16x128xf32, #tpu.memory_space<vmem>>, vector<16x128xf32>
    %5 = arith.subf %3, %4 : vector<16x128xf32>
    %6 = arith.mulf %5, %5 : vector<16x128xf32>
    %c0_4 = arith.constant 0 : index
    %c0_5 = arith.constant 0 : index
    %7 = vector.load %arg5[%c0_4, %c0_5] : memref<16x128xf32, #tpu.memory_space<vmem>>, vector<16x128xf32>
    %8 = arith.addf %7, %6 : vector<16x128xf32>
    %c0_6 = arith.constant 0 : index
    %c0_7 = arith.constant 0 : index
    %9 = vector.load %arg5[%c0_6, %c0_7] : memref<16x128xf32, #tpu.memory_space<vmem>>, vector<16x128xf32>
    tpu.vector_store %arg5[%c0_6, %c0_7], %8 {strides = array<i32>} : memref<16x128xf32, #tpu.memory_space<vmem>>, vector<16x128xf32>,
    %c0_i32_8 = arith.constant 0 : i32
    %10 = arith.cmpi eq, %arg1, %c0_i32_8 : i32
    %11 = arith.extui %10 : i1 to i32
    %c0_i32_9 = arith.constant 0 : i32
    %12 = arith.cmpi ne, %11, %c0_i32_9 : i32
    scf.if %12 {
      %c0_10 = arith.constant 0 : index
      %c0_11 = arith.constant 0 : index
      %13 = vector.load %arg5[%c0_10, %c0_11] : memref<16x128xf32, #tpu.memory_space<vmem>>, vector<16x128xf32>
      %14 = vector.shape_cast %13 : vector<16x128xf32> to vector<1x16x128xf32>
      %cst = arith.constant dense<0.000000e+00> : vector<1xf32>
      %15 = vector.multi_reduction <add>, %14, %cst [1, 2] : vector<1x16x128xf32> to vector<1xf32>
      %16 = vector.shape_cast %15 : vector<1xf32> to vector<1x1x1xf32>
      %17 = vector.extract %16[0, 0, 0] : f32 from vector<1x1x1xf32>
      %18 = vector.broadcast %17 : f32 to vector<1x8x128xf32>
      %c0_12 = arith.constant 0 : index
      %c0_13 = arith.constant 0 : index
      %c0_14 = arith.constant 0 : index
      %19 = vector.load %arg4[%c0_12, %c0_13, %c0_14] : memref<1x8x128xf32, #tpu.memory_space<vmem>>, vector<1x8x128xf32>
      tpu.vector_store %arg4[%c0_12, %c0_13, %c0_14], %18 {strides = array<i32>} : memref<1x8x128xf32, #tpu.memory_space<vmem>>, vector<1x8x128xf32>,
    } else {
    }
    return
  }
  func.func @transform_0(%arg0: i32, %arg1: i32) -> (i32, i32) {
    %c1_i32 = arith.constant 1 : i32
    %0 = arith.muli %arg0, %c1_i32 : i32
    %1 = arith.addi %0, %arg1 : i32
    %c0_i32 = arith.constant 0 : i32
    %c0_i32_0 = arith.constant 0 : i32
    return %1, %c0_i32 : i32, i32
  }
  func.func @transform_1(%arg0: i32, %arg1: i32) -> (i32, i32) {
    %c1_i32 = arith.constant 1 : i32
    %0 = arith.muli %arg0, %c1_i32 : i32
    %1 = arith.addi %0, %arg1 : i32
    %c0_i32 = arith.constant 0 : i32
    %c0_i32_0 = arith.constant 0 : i32
    return %1, %c0_i32 : i32, i32
  }
  func.func @transform_2(%arg0: i32, %arg1: i32) -> (i32, i32, i32) {
    %c0_i32 = arith.constant 0 : i32
    %c0_i32_0 = arith.constant 0 : i32
    %c0_i32_1 = arith.constant 0 : i32
    return %arg0, %c0_i32, %c0_i32_0 : i32, i32, i32
  }
}

</mosaic_0001>

<llo_original>
// kernel: hint_loss.1
$region0: #{hint_loss.1}
  #allocation0 [shape = 'u32[]', space=smem, size = 0x4, offset = 0x4, fixed_abs, tag = 'smem constant byte address 0x4 - core index']
  #allocation1 [shape = 'u32[144,128]{1,0:T(1,128)}', space=vmem, size = 0x12000, scoped, tag = 'internal scratch']
  #allocation2 [shape = 'f32[16,128]{1,0:T(8,128)}', space=vmem, size = 0x2000, scoped, tag = 'scratch operand']
  %s0 = inlined_call_operand.vmem [shape: f32[16,128], index: 0, kind: input, shape index: {}]
  %s1 = inlined_call_operand.vmem [shape: f32[16,128], index: 1, kind: input, shape index: {}]
  %s2 = inlined_call_operand.vmem [shape: f32[1,8,128], index: 2, kind: output, shape index: {}]
  %s3 = sld [smem:[#allocation0]]
  $region26: #{hint_loss.1} parent=0
    _
  %s5 = ssub.s32 1, %s3
  %s6 = scalar_select 0, %s5, %s3
  // Predicated region
  $region2: #{hint_loss.1} parent=0 // pred_check
    _
  $region3: #{hint_loss.1} parent=0 // pred_check_branch
    %8 = sbr.rel (0) target = $region5
  $region4: #{hint_loss.1} parent=0 // pred_region
    %s9 = sadd.s32 0, 0
    %s10 = smul.u32 2, %s9
    %p11 = scmp.lt.s32.totalorder %s10, 1
    %s12 = scalar_select %p11, %s10, 1
    %s13 = smul.addr %s12, 8
    %s14 = scalar_lea.vmem %s0, %s13
    %s15 = sadd.s32 0, 0
    %s16 = smul.u32 2, %s15
  $region5: #{hint_loss.1} parent=0 // pred_fallthru
    _
  // Predicated region
  $region6: #{hint_loss.1} parent=0 // pred_check
    _
  $region7: #{hint_loss.1} parent=0 // pred_check_branch
    %18 = sbr.rel (0) target = $region9
  $region8: #{hint_loss.1} parent=0 // pred_region
    %s19 = sadd.s32 0, 0
    %s20 = smul.u32 2, %s19
    %p21 = scmp.lt.s32.totalorder %s20, 1
    %s22 = scalar_select %p21, %s20, 1
    %s23 = smul.addr %s22, 8
    %s24 = scalar_lea.vmem %s1, %s23
    %s25 = sadd.s32 0, 0
    %s26 = smul.u32 2, %s25
  $region9: #{hint_loss.1} parent=0 // pred_fallthru
    _
  %s27 = sadd.s32 0, 0
  %s28 = smul.u32 2, %s27
  %p29 = scmp.lt.s32.totalorder %s28, 1
  %s30 = scalar_select %p29, %s28, 1
  %s31 = smul.addr %s30, 8
  %s32 = scalar_lea.vmem %s0, %s31
  %s33 = sadd.s32 0, 0
  %s34 = smul.u32 2, %s33
  %p35 = scmp.lt.s32.totalorder %s34, 1
  %s36 = scalar_select %p35, %s34, 1
  %s37 = smul.addr %s36, 8
  %s38 = scalar_lea.vmem %s1, %s37
  %s39 = sadd.s32 0, 0
  %s40 = smul.u32 2, %s39
  %p41 = scmp.lt.s32.totalorder %s40, 1
  %s42 = scalar_select %p41, %s40, 1
  %s43 = smul.addr %s42, 8
  %s44 = scalar_lea.vmem %s0, %s43
  %s45 = sadd.s32 0, 0
  %s46 = smul.u32 2, %s45
  %s47 = sadd.s32 0, 0
  %s48 = smul.u32 2, %s47
  %p49 = scmp.lt.s32.totalorder %s48, 1
  %s50 = scalar_select %p49, %s48, 1
  %s51 = smul.addr %s50, 8
  %s52 = scalar_lea.vmem %s1, %s51
  %s53 = sadd.s32 0, 0
  %s54 = smul.u32 2, %s53
  %p55 = scmp.eq.s32.totalorder 0, 0
  // Predicated region
  $region10: #{hint_loss.1} parent=0 // pred_check
    %p56 = pneg %p55
  $region11: #{hint_loss.1} parent=0 // pred_check_branch
    %58 = sbr.rel (%p56) target = $region13
  $region12: #{hint_loss.1} parent=0 // pred_region
    %59 = vst [vmem:[#allocation2] sm:$0xff] 0.0
    %60 = vst [vmem:[#allocation2 + $0x8] sm:$0xff] 0.0
  $region13: #{hint_loss.1} parent=0 // pred_fallthru
    _
  %v61 = vld [vmem:[%s44] sm:$0xff]
  %v62 = vld [vmem:[%s44 + $0x8] sm:$0xff]
  %v63 = vld [vmem:[%s52] sm:$0xff]
  %v64 = vld [vmem:[%s52 + $0x8] sm:$0xff]
  %v65 = vsub.f32 %v61, %v63
  %v66 = vsub.f32 %v62, %v64
  %v67 = vmul.f32 %v65, %v65
  %v68 = vmul.f32 %v66, %v66
  %v69 = vld [vmem:[#allocation2] sm:$0xff]
  %v70 = vld [vmem:[#allocation2 + $0x8] sm:$0xff]
  %v71 = vadd.f32 %v69, %v67
  %v72 = vadd.f32 %v70, %v68
  %73 = vst [vmem:[#allocation2] sm:$0xff] %v71
  %74 = vst [vmem:[#allocation2 + $0x8] sm:$0xff] %v72
  // Predicated region
  $region14: #{hint_loss.1} parent=0 // pred_check
    %p75 = pneg %p55
  $region15: #{hint_loss.1} parent=0 // pred_check_branch
    %77 = sbr.rel (%p75) target = $region17
  $region16: #{hint_loss.1} parent=0 // pred_region
    %v78 = vld [vmem:[#allocation2] sm:$0xff]
    %v79 = vld [vmem:[#allocation2 + $0x8] sm:$0xff]
    %v80 = vadd.f32 %v78, %v79
    %81 = vadd.xlane.f32.xlu0 %v80
    %v82 = vpop.xlane.xlu0 %81
    %v83 = vrot.slane %v82, 4
    %v84 = vadd.f32 %v82, %v83
    %v85 = vrot.slane %v84, 2
    %v86 = vadd.f32 %v84, %v85
    %v87 = vrot.slane %v86, 1
    %v88 = vadd.f32 %v86, %v87
    %s89 = vtos %v88
    %v90 = vstv %s89
    %91 = vst [vmem:[%s2] sm:$0xff] %v90
  $region17: #{hint_loss.1} parent=0 // pred_fallthru
    _
  // Predicated region
  $region18: #{hint_loss.1} parent=0 // pred_check
    _
  $region19: #{hint_loss.1} parent=0 // pred_check_branch
    %93 = sbr.rel (0) target = $region21
  $region20: #{hint_loss.1} parent=0 // pred_region
    _
  $region21: #{hint_loss.1} parent=0 // pred_fallthru
    _
  // Predicated region
  $region22: #{hint_loss.1} parent=0 // pred_check
    _
  $region23: #{hint_loss.1} parent=0 // pred_check_branch
    %95 = sbr.rel (0) target = $region25
  $region24: #{hint_loss.1} parent=0 // pred_region
    _
  $region25: #{hint_loss.1} parent=0 // pred_fallthru
    _

</llo_original>
